<compile_context>
chip_gen: v6e
topology: v6e:2x2x1
jax: 0.10.0
libtpu: 0.0.40
codegen_flags: <defaults>
</compile_context>

<pallas_src>
import jax
import jax.numpy as jnp
from jax.experimental import pallas as pl
from jax.experimental.pallas import tpu as pltpu

IN_FEATURES = 144  # fixed by the module (3D 24-body problem: 24*3*2 = 144)
LANE = 128
SUBLANE = 8


def _round_up(x, m):
    return (x + m - 1) // m * m


def _hnn_kernel(y_ref, w1_ref, b1_ref, w2_ref, b2_ref, w3_ref, b3_ref,
                w4_ref, out_ref):
    # Layer 1: [TB,144](bf16) @ [144,Hp](bf16) -> f32 acc, + bias, tanh (f32)
    h = jnp.tanh(
        jnp.dot(y_ref[...], w1_ref[...], preferred_element_type=jnp.float32)
        + b1_ref[...])
    # Layer 2
    h = jnp.tanh(
        jnp.dot(h.astype(jnp.bfloat16), w2_ref[...],
                preferred_element_type=jnp.float32) + b2_ref[...])
    # Layer 3
    h = jnp.tanh(
        jnp.dot(h.astype(jnp.bfloat16), w3_ref[...],
                preferred_element_type=jnp.float32) + b3_ref[...])
    # Layer 4 (no bias), out_features=1: VPU multiply + lane reduction
    # (keeps the MXU out of a 1-column matmul).
    out_ref[...] = jnp.sum(h * w4_ref[...], axis=-1,
                           keepdims=True).astype(out_ref.dtype)


def hnn_forward(y, prepared_params, *, block_b=1024):
    """Fused HNN forward. y: [B, 144]. Returns [B, 1] float32."""
    w1, b1, w2, b2, w3, b3, w4 = prepared_params
    B, K = y.shape
    assert K == w1.shape[0], (K, w1.shape)
    Hp = w1.shape[1]

    # Batch tile: multiple of 8 sublanes, capped by block_b; pad B up to a
    # multiple of the tile so every grid step is full.
    TB = min(_round_up(block_b, SUBLANE), _round_up(B, SUBLANE))
    B_pad = _round_up(B, TB)
    if B_pad != B:
        y = jnp.pad(y, ((0, B_pad - B), (0, 0)))
    # bf16 input stream halves HBM bytes (ideally the caller already feeds bf16).
    y = y.astype(jnp.bfloat16)

    grid = (B_pad // TB,)

    def resident(shape):
        # Weight/bias blocks: full array, same block every step -> stays in VMEM.
        return pl.BlockSpec(shape, lambda i: (0,) * len(shape))

    flops = 2 * B_pad * (K * Hp + 2 * Hp * Hp + Hp)
    transcendentals = 3 * B_pad * Hp
    bytes_accessed = (B_pad * K * 2                  # streamed y (bf16)
                      + B_pad * 4                    # output (f32)
                      + (K * Hp + 2 * Hp * Hp) * 2   # bf16 matmul weights
                      + 4 * Hp * 4)                  # f32 biases + final row

    out = pl.pallas_call(
        _hnn_kernel,
        out_shape=jax.ShapeDtypeStruct((B_pad, 1), jnp.float32),
        grid=grid,
        in_specs=[
            pl.BlockSpec((TB, K), lambda i: (i, 0)),   # streamed y tile
            resident(w1.shape), resident(b1.shape),
            resident(w2.shape), resident(b2.shape),
            resident(w3.shape), resident(b3.shape),
            resident(w4.shape),
        ],
        out_specs=pl.BlockSpec((TB, 1), lambda i: (i, 0)),
        compiler_params=pltpu.CompilerParams(
            dimension_semantics=("parallel",),
            vmem_limit_bytes=32 << 20),
        cost_estimate=pl.CostEstimate(
            flops=flops,
            transcendentals=transcendentals,
            bytes_accessed=bytes_accessed),
    )(y, w1, b1, w2, b2, w3, b3, w4)

    return out[:B]


def init_hnn_params_torch(key, n_hidden):
    """Parameters in the PyTorch layout: weights (out,in) ~ N(0,0.1), biases (out,).

    (Biases also use N(0,0.1) as a deterministic stand-in for PyTorch's
    default Linear bias init.)
    """
    ks = jax.random.split(key, 7)
    std = 0.1
    H = n_hidden
    w1 = std * jax.random.normal(ks[0], (H, IN_FEATURES), jnp.float32)
    b1 = std * jax.random.normal(ks[1], (H,), jnp.float32)
    w2 = std * jax.random.normal(ks[2], (H, H), jnp.float32)
    b2 = std * jax.random.normal(ks[3], (H,), jnp.float32)
    w3 = std * jax.random.normal(ks[4], (H, H), jnp.float32)
    b3 = std * jax.random.normal(ks[5], (H,), jnp.float32)
    w4 = std * jax.random.normal(ks[6], (1, H), jnp.float32)
    return (w1, b1, w2, b2, w3, b3, w4)


def prepare_params(torch_params, pad_hidden_to=LANE):
    """One-time preprocessing for the kernel:
      * transpose (out,in) -> (in,out) so the kernel does row-major matmuls
      * zero-pad hidden dim to a multiple of 128 (lane-dense activations)
      * matmul weights -> bf16; biases and the final row -> f32, shape (1,Hp)
    Zero padding is mathematically inert.
    """
    w1, b1, w2, b2, w3, b3, w4 = torch_params
    H = w1.shape[0]
    Hp = _round_up(H, pad_hidden_to)
    ph = Hp - H

    def pad_cols(x):   # (r, H) -> (r, Hp)
        return jnp.pad(x, ((0, 0), (0, ph)))

    def pad_both(x):   # (H, H) -> (Hp, Hp)
        return jnp.pad(x, ((0, ph), (0, ph)))

    w1_p = pad_cols(w1.T).astype(jnp.bfloat16)          # (144, Hp) bf16
    w2_p = pad_both(w2.T).astype(jnp.bfloat16)          # (Hp, Hp) bf16
    w3_p = pad_both(w3.T).astype(jnp.bfloat16)          # (Hp, Hp) bf16
    b1_p = pad_cols(b1[None, :]).astype(jnp.float32)    # (1, Hp) f32
    b2_p = pad_cols(b2[None, :]).astype(jnp.float32)
    b3_p = pad_cols(b3[None, :]).astype(jnp.float32)
    w4_p = pad_cols(w4).astype(jnp.float32)             # (1, Hp) f32
    return (w1_p, b1_p, w2_p, b2_p, w3_p, b3_p, w4_p)


def hnn_forward_ref_f32(y, torch_params):
    """Pure f32 reference matching the original PyTorch module."""
    w1, b1, w2, b2, w3, b3, w4 = torch_params
    h = jnp.tanh(y @ w1.T + b1)
    h = jnp.tanh(h @ w2.T + b2)
    h = jnp.tanh(h @ w3.T + b3)
    return h @ w4.T


def hnn_forward_ref_mixed(y, prepared_params):
    """Plain-JAX mirror of the kernel's bf16-storage / f32-accumulate math."""
    w1, b1, w2, b2, w3, b3, w4 = prepared_params
    f32 = lambda a: a.astype(jnp.float32)
    hi = jax.lax.Precision.HIGHEST
    yb = f32(y.astype(jnp.bfloat16))
    h = jnp.tanh(jnp.dot(yb, f32(w1), precision=hi) + b1)
    h = jnp.tanh(jnp.dot(f32(h.astype(jnp.bfloat16)), f32(w2), precision=hi) + b2)
    h = jnp.tanh(jnp.dot(f32(h.astype(jnp.bfloat16)), f32(w3), precision=hi) + b3)
    return jnp.sum(h * w4, axis=-1, keepdims=True)


# TODO(synk): derivative()/sympletic() need gradients of the forward; that
# requires a custom VJP around the pallas_call and is out of scope here.


if __name__ == "__main__":
    key = jax.random.PRNGKey(0)
    k_param, k_data = jax.random.split(key)

    n_hidden = 32
    batch = 100  # deliberately not a multiple of the batch tile (tests padding)

    torch_params = init_hnn_params_torch(k_param, n_hidden)
    params = prepare_params(torch_params)
    y = jax.random.normal(k_data, (batch, IN_FEATURES), jnp.float32)

    # Small block so the demo exercises a multi-step pipelined grid (4 steps).
    out = hnn_forward(y, params, block_b=32)
    out = jax.block_until_ready(out)
    assert out.shape == (batch, 1), out.shape

    # Tight check against a plain-JAX mirror of the kernel's exact math.
    ref_exact = hnn_forward_ref_mixed(y, params)
    assert jnp.allclose(out, ref_exact, atol=1e-4, rtol=1e-4), (
        "mixed-precision mirror mismatch, max abs diff = "
        f"{float(jnp.max(jnp.abs(out - ref_exact)))}")

    # Loose check against the original f32 module semantics (bf16 rounding).
    ref_f32 = hnn_forward_ref_f32(y, torch_params)
    assert jnp.allclose(out, ref_f32, atol=5e-2, rtol=0.0), (
        "f32 reference mismatch, max abs diff = "
        f"{float(jnp.max(jnp.abs(out - ref_f32)))}")

    print("KERNEL_OK")
</pallas_src>

<mosaic_0001>
module attributes {stable_mosaic.version = 11 : i64} {
  func.func @_hnn_kernel(%arg0: i32, %arg1: memref<32x144xbf16, #tpu.memory_space<vmem>>, %arg2: memref<144x128xbf16, #tpu.memory_space<vmem>>, %arg3: memref<1x128xf32, #tpu.memory_space<vmem>>, %arg4: memref<128x128xbf16, #tpu.memory_space<vmem>>, %arg5: memref<1x128xf32, #tpu.memory_space<vmem>>, %arg6: memref<128x128xbf16, #tpu.memory_space<vmem>>, %arg7: memref<1x128xf32, #tpu.memory_space<vmem>>, %arg8: memref<1x128xf32, #tpu.memory_space<vmem>>, %arg9: memref<32x1xf32, #tpu.memory_space<vmem>>) attributes {dimension_semantics = [#tpu.dimension_semantics<parallel>], iteration_bounds = array<i64: 4>, scalar_prefetch = 0 : i64, scratch_operands = 0 : i64, tpu.core_type = #tpu.core_type<tc>, window_params = [{transform_indices = @transform_0, window_bounds = array<i64: 32, 144>}, {pipeline_mode = #tpu.pipeline_mode<synchronous>, transform_indices = @transform_1, window_bounds = array<i64: 144, 128>}, {pipeline_mode = #tpu.pipeline_mode<synchronous>, transform_indices = @transform_2, window_bounds = array<i64: 1, 128>}, {pipeline_mode = #tpu.pipeline_mode<synchronous>, transform_indices = @transform_3, window_bounds = array<i64: 128, 128>}, {pipeline_mode = #tpu.pipeline_mode<synchronous>, transform_indices = @transform_4, window_bounds = array<i64: 1, 128>}, {pipeline_mode = #tpu.pipeline_mode<synchronous>, transform_indices = @transform_5, window_bounds = array<i64: 128, 128>}, {pipeline_mode = #tpu.pipeline_mode<synchronous>, transform_indices = @transform_6, window_bounds = array<i64: 1, 128>}, {pipeline_mode = #tpu.pipeline_mode<synchronous>, transform_indices = @transform_7, window_bounds = array<i64: 1, 128>}, {transform_indices = @transform_8, window_bounds = array<i64: 32, 1>}]} {
    %c0 = arith.constant 0 : index
    %c0_0 = arith.constant 0 : index
    %0 = vector.load %arg1[%c0, %c0_0] : memref<32x144xbf16, #tpu.memory_space<vmem>>, vector<32x144xbf16>
    %c0_1 = arith.constant 0 : index
    %c0_2 = arith.constant 0 : index
    %1 = vector.load %arg2[%c0_1, %c0_2] : memref<144x128xbf16, #tpu.memory_space<vmem>>, vector<144x128xbf16>
    %cst = arith.constant dense<0.000000e+00> : vector<32x128xf32>
    %2 = tpu.matmul %0, %1, %cst {dimension_numbers = #tpu.dot_dimension_numbers<[1], [0], [0], [1], [0, 0, 1, 1], [], []>} : vector<32x144xbf16>, vector<144x128xbf16>, vector<32x128xf32> -> vector<32x128xf32>
    %c0_3 = arith.constant 0 : index
    %c0_4 = arith.constant 0 : index
    %3 = vector.load %arg3[%c0_3, %c0_4] : memref<1x128xf32, #tpu.memory_space<vmem>>, vector<1x128xf32>
    %4 = vector.broadcast %3 : vector<1x128xf32> to vector<32x128xf32>
    %5 = arith.addf %2, %4 : vector<32x128xf32>
    %6 = math.tanh %5 : vector<32x128xf32>
    %7 = arith.truncf %6 : vector<32x128xf32> to vector<32x128xbf16>
    %c0_5 = arith.constant 0 : index
    %c0_6 = arith.constant 0 : index
    %8 = vector.load %arg4[%c0_5, %c0_6] : memref<128x128xbf16, #tpu.memory_space<vmem>>, vector<128x128xbf16>
    %cst_7 = arith.constant dense<0.000000e+00> : vector<32x128xf32>
    %9 = tpu.matmul %7, %8, %cst_7 {dimension_numbers = #tpu.dot_dimension_numbers<[1], [0], [0], [1], [0, 0, 1, 1], [], []>} : vector<32x128xbf16>, vector<128x128xbf16>, vector<32x128xf32> -> vector<32x128xf32>
    %c0_8 = arith.constant 0 : index
    %c0_9 = arith.constant 0 : index
    %10 = vector.load %arg5[%c0_8, %c0_9] : memref<1x128xf32, #tpu.memory_space<vmem>>, vector<1x128xf32>
    %11 = vector.broadcast %10 : vector<1x128xf32> to vector<32x128xf32>
    %12 = arith.addf %9, %11 : vector<32x128xf32>
    %13 = math.tanh %12 : vector<32x128xf32>
    %14 = arith.truncf %13 : vector<32x128xf32> to vector<32x128xbf16>
    %c0_10 = arith.constant 0 : index
    %c0_11 = arith.constant 0 : index
    %15 = vector.load %arg6[%c0_10, %c0_11] : memref<128x128xbf16, #tpu.memory_space<vmem>>, vector<128x128xbf16>
    %cst_12 = arith.constant dense<0.000000e+00> : vector<32x128xf32>
    %16 = tpu.matmul %14, %15, %cst_12 {dimension_numbers = #tpu.dot_dimension_numbers<[1], [0], [0], [1], [0, 0, 1, 1], [], []>} : vector<32x128xbf16>, vector<128x128xbf16>, vector<32x128xf32> -> vector<32x128xf32>
    %c0_13 = arith.constant 0 : index
    %c0_14 = arith.constant 0 : index
    %17 = vector.load %arg7[%c0_13, %c0_14] : memref<1x128xf32, #tpu.memory_space<vmem>>, vector<1x128xf32>
    %18 = vector.broadcast %17 : vector<1x128xf32> to vector<32x128xf32>
    %19 = arith.addf %16, %18 : vector<32x128xf32>
    %20 = math.tanh %19 : vector<32x128xf32>
    %c0_15 = arith.constant 0 : index
    %c0_16 = arith.constant 0 : index
    %21 = vector.load %arg8[%c0_15, %c0_16] : memref<1x128xf32, #tpu.memory_space<vmem>>, vector<1x128xf32>
    %22 = vector.broadcast %21 : vector<1x128xf32> to vector<32x128xf32>
    %23 = arith.mulf %20, %22 : vector<32x128xf32>
    %cst_17 = arith.constant dense<0.000000e+00> : vector<32xf32>
    %24 = vector.multi_reduction <add>, %23, %cst_17 [1] : vector<32x128xf32> to vector<32xf32>
    %25 = vector.shape_cast %24 : vector<32xf32> to vector<32x1xf32>
    %c0_18 = arith.constant 0 : index
    %c0_19 = arith.constant 0 : index
    %26 = vector.load %arg9[%c0_18, %c0_19] : memref<32x1xf32, #tpu.memory_space<vmem>>, vector<32x1xf32>
    tpu.vector_store %arg9[%c0_18, %c0_19], %25 {strides = array<i32>} : memref<32x1xf32, #tpu.memory_space<vmem>>, vector<32x1xf32>,
    return
  }
  func.func @transform_0(%arg0: i32) -> (i32, i32) {
    %c0_i32 = arith.constant 0 : i32
    %c0_i32_0 = arith.constant 0 : i32
    return %arg0, %c0_i32 : i32, i32
  }
  func.func @transform_1(%arg0: i32) -> (i32, i32) {
    %c0_i32 = arith.constant 0 : i32
    %c0_i32_0 = arith.constant 0 : i32
    %c0_i32_1 = arith.constant 0 : i32
    return %c0_i32, %c0_i32_0 : i32, i32
  }
  func.func @transform_2(%arg0: i32) -> (i32, i32) {
    %c0_i32 = arith.constant 0 : i32
    %c0_i32_0 = arith.constant 0 : i32
    %c0_i32_1 = arith.constant 0 : i32
    return %c0_i32, %c0_i32_0 : i32, i32
  }
  func.func @transform_3(%arg0: i32) -> (i32, i32) {
    %c0_i32 = arith.constant 0 : i32
    %c0_i32_0 = arith.constant 0 : i32
    %c0_i32_1 = arith.constant 0 : i32
    return %c0_i32, %c0_i32_0 : i32, i32
  }
  func.func @transform_4(%arg0: i32) -> (i32, i32) {
    %c0_i32 = arith.constant 0 : i32
    %c0_i32_0 = arith.constant 0 : i32
    %c0_i32_1 = arith.constant 0 : i32
    return %c0_i32, %c0_i32_0 : i32, i32
  }
  func.func @transform_5(%arg0: i32) -> (i32, i32) {
    %c0_i32 = arith.constant 0 : i32
    %c0_i32_0 = arith.constant 0 : i32
    %c0_i32_1 = arith.constant 0 : i32
    return %c0_i32, %c0_i32_0 : i32, i32
  }
  func.func @transform_6(%arg0: i32) -> (i32, i32) {
    %c0_i32 = arith.constant 0 : i32
    %c0_i32_0 = arith.constant 0 : i32
    %c0_i32_1 = arith.constant 0 : i32
    return %c0_i32, %c0_i32_0 : i32, i32
  }
  func.func @transform_7(%arg0: i32) -> (i32, i32) {
    %c0_i32 = arith.constant 0 : i32
    %c0_i32_0 = arith.constant 0 : i32
    %c0_i32_1 = arith.constant 0 : i32
    return %c0_i32, %c0_i32_0 : i32, i32
  }
  func.func @transform_8(%arg0: i32) -> (i32, i32) {
    %c0_i32 = arith.constant 0 : i32
    %c0_i32_0 = arith.constant 0 : i32
    return %arg0, %c0_i32 : i32, i32
  }
}

</mosaic_0001>

<llo_original>
// kernel: tpu_custom_call.1
$region0: #{tpu_custom_call.1}
  #allocation0 [shape = 'u32[]', space=smem, size = 0x4, offset = 0x4, fixed_abs, tag = 'smem constant byte address 0x4 - core index']
  #allocation1 [shape = 'u32[144,128]{1,0:T(1,128)}', space=vmem, size = 0x12000, scoped, tag = 'internal scratch']
  %s0 = inlined_call_operand.vmem [shape: bf16[128,144], index: 0, kind: input, shape index: {}]
  %s1 = inlined_call_operand.vmem [shape: bf16[144,128], index: 1, kind: input, shape index: {}]
  %s2 = inlined_call_operand.vmem [shape: f32[1,128], index: 2, kind: input, shape index: {}]
  %s3 = inlined_call_operand.vmem [shape: bf16[128,128], index: 3, kind: input, shape index: {}]
  %s4 = inlined_call_operand.vmem [shape: f32[1,128], index: 4, kind: input, shape index: {}]
  %s5 = inlined_call_operand.vmem [shape: bf16[128,128], index: 5, kind: input, shape index: {}]
  %s6 = inlined_call_operand.vmem [shape: f32[1,128], index: 6, kind: input, shape index: {}]
  %s7 = inlined_call_operand.vmem [shape: f32[1,128], index: 7, kind: input, shape index: {}]
  %s8 = inlined_call_operand.vmem [shape: f32[128,1], index: 8, kind: output, shape index: {}]
  %s9 = sld [smem:[#allocation0]]
  $region65: #{tpu_custom_call.1} parent=0
    _
  %s11 = ssub.s32 1, %s9
  %s12 = scalar_select 0, %s11, %s9
  loop: start=0, step=1, limit=6
  $region2: #{tpu_custom_call.1} parent=0 // loop_pre_header
    _
  $region3: #{tpu_custom_call.1} parent=0 // loop_header
    %s14 = sphi 0, %s18
    %p15 = scmp.ge.s32.totalorder %s14, 6
    %s24 = sphi 0, %s26
    %s27 = sphi 0, %s24
    %s28 = sphi 0, %s27
    %s44 = sphi 0, %s28
    %s48 = sphi 0, %s48
    %s50 = sphi 0, %s48
    %s51 = sphi 0, %s50
    %s65 = sphi 0, %s51
    %s69 = sphi 0, %s69
    %s71 = sphi 0, %s69
    %s72 = sphi 0, %s71
    %s86 = sphi 0, %s72
    %s90 = sphi 0, %s90
    %s92 = sphi 0, %s90
    %s93 = sphi 0, %s92
    %s107 = sphi 0, %s93
    %s111 = sphi 0, %s111
    %s113 = sphi 0, %s111
    %s114 = sphi 0, %s113
    %s128 = sphi 0, %s114
    %s132 = sphi 0, %s132
    %s134 = sphi 0, %s132
    %s135 = sphi 0, %s134
    %s149 = sphi 0, %s135
    %s153 = sphi 0, %s153
    %s155 = sphi 0, %s153
    %s156 = sphi 0, %s155
    %s170 = sphi 0, %s156
    %s174 = sphi 0, %s174
    %s176 = sphi 0, %s174
    %s177 = sphi 0, %s176
    %s191 = sphi 0, %s177
    %s197 = sphi 0, %s199
    %s200 = sphi 0, %s197
    %s201 = sphi 0, %s200
    %s217 = sphi 0, %s201
  $region4: #{tpu_custom_call.1} parent=0 // loop_header_branch
    %17 = sbr.rel (%p15) target = $region8
  $region5: #{tpu_custom_call.1} parent=0 // loop_body
    %s19 = ssub.s32 %s14, 1
    %s20 = ssub.s32 %s14, 2
    %s21 = sadd.s32 %s14, 1
    %s22 = ssub.s32 %s14, %s21
    %p23 = scmp.eq.s32.totalorder %s22, 0
    %s25 = sadd.s32 %s24, 1
    %s26 = scalar_select %p23, %s24, %s25
    %p29 = pneg %p23
    %p30 = scmp.eq.s32.totalorder %s14, 3
    %p31 = por %p29, %p30
    %p32 = scmp.ne.s32.totalorder %s24, %s27
    %p33 = scmp.eq.s32.totalorder %s14, 0
    %p34 = por %p32, %p33
    %p35 = scmp.ne.s32.totalorder %s24, %s27
    %p36 = scmp.eq.s32.totalorder %s19, 3
    %p37 = por %p35, %p36
    %p38 = scmp.ne.s32.totalorder %s27, %s28
    %p39 = scmp.eq.s32.totalorder %s19, 0
    %p40 = por %p38, %p39
    %p41 = scmp.ne.s32.totalorder %s27, %s28
    %p42 = scmp.eq.s32.totalorder %s20, 3
    %p43 = por %p41, %p42
    %p45 = scmp.ne.s32.totalorder %s28, %s44
    %p46 = scmp.eq.s32.totalorder %s20, 0
    %p47 = por %p45, %p46
    %s49 = sadd.s32 %s48, 1
    %p52 = scmp.eq.s32.totalorder %s14, 3
    %p53 = scmp.ne.s32.totalorder %s48, %s50
    %p54 = scmp.eq.s32.totalorder %s14, 0
    %p55 = por %p53, %p54
    %p56 = scmp.ne.s32.totalorder %s48, %s50
    %p57 = scmp.eq.s32.totalorder %s19, 3
    %p58 = por %p56, %p57
    %p59 = scmp.ne.s32.totalorder %s50, %s51
    %p60 = scmp.eq.s32.totalorder %s19, 0
    %p61 = por %p59, %p60
    %p62 = scmp.ne.s32.totalorder %s50, %s51
    %p63 = scmp.eq.s32.totalorder %s20, 3
    %p64 = por %p62, %p63
    %p66 = scmp.ne.s32.totalorder %s51, %s65
    %p67 = scmp.eq.s32.totalorder %s20, 0
    %p68 = por %p66, %p67
    %s70 = sadd.s32 %s69, 1
    %p73 = scmp.eq.s32.totalorder %s14, 3
    %p74 = scmp.ne.s32.totalorder %s69, %s71
    %p75 = scmp.eq.s32.totalorder %s14, 0
    %p76 = por %p74, %p75
    %p77 = scmp.ne.s32.totalorder %s69, %s71
    %p78 = scmp.eq.s32.totalorder %s19, 3
    %p79 = por %p77, %p78
    %p80 = scmp.ne.s32.totalorder %s71, %s72
    %p81 = scmp.eq.s32.totalorder %s19, 0
    %p82 = por %p80, %p81
    %p83 = scmp.ne.s32.totalorder %s71, %s72
    %p84 = scmp.eq.s32.totalorder %s20, 3
    %p85 = por %p83, %p84
    %p87 = scmp.ne.s32.totalorder %s72, %s86
    %p88 = scmp.eq.s32.totalorder %s20, 0
    %p89 = por %p87, %p88
    %s91 = sadd.s32 %s90, 1
    %p94 = scmp.eq.s32.totalorder %s14, 3
    %p95 = scmp.ne.s32.totalorder %s90, %s92
    %p96 = scmp.eq.s32.totalorder %s14, 0
    %p97 = por %p95, %p96
    %p98 = scmp.ne.s32.totalorder %s90, %s92
    %p99 = scmp.eq.s32.totalorder %s19, 3
    %p100 = por %p98, %p99
    %p101 = scmp.ne.s32.totalorder %s92, %s93
    %p102 = scmp.eq.s32.totalorder %s19, 0
    %p103 = por %p101, %p102
    %p104 = scmp.ne.s32.totalorder %s92, %s93
    %p105 = scmp.eq.s32.totalorder %s20, 3
    %p106 = por %p104, %p105
    %p108 = scmp.ne.s32.totalorder %s93, %s107
    %p109 = scmp.eq.s32.totalorder %s20, 0
    %p110 = por %p108, %p109
    %s112 = sadd.s32 %s111, 1
    %p115 = scmp.eq.s32.totalorder %s14, 3
    %p116 = scmp.ne.s32.totalorder %s111, %s113
    %p117 = scmp.eq.s32.totalorder %s14, 0
    %p118 = por %p116, %p117
    %p119 = scmp.ne.s32.totalorder %s111, %s113
    %p120 = scmp.eq.s32.totalorder %s19, 3
    %p121 = por %p119, %p120
    %p122 = scmp.ne.s32.totalorder %s113, %s114
    %p123 = scmp.eq.s32.totalorder %s19, 0
    %p124 = por %p122, %p123
    %p125 = scmp.ne.s32.totalorder %s113, %s114
    %p126 = scmp.eq.s32.totalorder %s20, 3
    %p127 = por %p125, %p126
    %p129 = scmp.ne.s32.totalorder %s114, %s128
    %p130 = scmp.eq.s32.totalorder %s20, 0
    %p131 = por %p129, %p130
    %s133 = sadd.s32 %s132, 1
    %p136 = scmp.eq.s32.totalorder %s14, 3
    %p137 = scmp.ne.s32.totalorder %s132, %s134
    %p138 = scmp.eq.s32.totalorder %s14, 0
    %p139 = por %p137, %p138
    %p140 = scmp.ne.s32.totalorder %s132, %s134
    %p141 = scmp.eq.s32.totalorder %s19, 3
    %p142 = por %p140, %p141
    %p143 = scmp.ne.s32.totalorder %s134, %s135
    %p144 = scmp.eq.s32.totalorder %s19, 0
    %p145 = por %p143, %p144
    %p146 = scmp.ne.s32.totalorder %s134, %s135
    %p147 = scmp.eq.s32.totalorder %s20, 3
    %p148 = por %p146, %p147
    %p150 = scmp.ne.s32.totalorder %s135, %s149
    %p151 = scmp.eq.s32.totalorder %s20, 0
    %p152 = por %p150, %p151
    %s154 = sadd.s32 %s153, 1
    %p157 = scmp.eq.s32.totalorder %s14, 3
    %p158 = scmp.ne.s32.totalorder %s153, %s155
    %p159 = scmp.eq.s32.totalorder %s14, 0
    %p160 = por %p158, %p159
    %p161 = scmp.ne.s32.totalorder %s153, %s155
    %p162 = scmp.eq.s32.totalorder %s19, 3
    %p163 = por %p161, %p162
    %p164 = scmp.ne.s32.totalorder %s155, %s156
    %p165 = scmp.eq.s32.totalorder %s19, 0
    %p166 = por %p164, %p165
    %p167 = scmp.ne.s32.totalorder %s155, %s156
    %p168 = scmp.eq.s32.totalorder %s20, 3
    %p169 = por %p167, %p168
    %p171 = scmp.ne.s32.totalorder %s156, %s170
    %p172 = scmp.eq.s32.totalorder %s20, 0
    %p173 = por %p171, %p172
    %s175 = sadd.s32 %s174, 1
    %p178 = scmp.eq.s32.totalorder %s14, 3
    %p179 = scmp.ne.s32.totalorder %s174, %s176
    %p180 = scmp.eq.s32.totalorder %s14, 0
    %p181 = por %p179, %p180
    %p182 = scmp.ne.s32.totalorder %s174, %s176
    %p183 = scmp.eq.s32.totalorder %s19, 3
    %p184 = por %p182, %p183
    %p185 = scmp.ne.s32.totalorder %s176, %s177
    %p186 = scmp.eq.s32.totalorder %s19, 0
    %p187 = por %p185, %p186
    %p188 = scmp.ne.s32.totalorder %s176, %s177
    %p189 = scmp.eq.s32.totalorder %s20, 3
    %p190 = por %p188, %p189
    %p192 = scmp.ne.s32.totalorder %s177, %s191
    %p193 = scmp.eq.s32.totalorder %s20, 0
    %p194 = por %p192, %p193
    %s195 = ssub.s32 %s14, %s21
    %p196 = scmp.eq.s32.totalorder %s195, 0
    %s198 = sadd.s32 %s197, 1
    %s199 = scalar_select %p196, %s197, %s198
    %p202 = pneg %p196
    %p203 = scmp.eq.s32.totalorder %s14, 3
    %p204 = por %p202, %p203
    %p205 = scmp.ne.s32.totalorder %s197, %s200
    %p206 = scmp.eq.s32.totalorder %s14, 0
    %p207 = por %p205, %p206
    %p208 = scmp.ne.s32.totalorder %s197, %s200
    %p209 = scmp.eq.s32.totalorder %s19, 3
    %p210 = por %p208, %p209
    %p211 = scmp.ne.s32.totalorder %s200, %s201
    %p212 = scmp.eq.s32.totalorder %s19, 0
    %p213 = por %p211, %p212
    %p214 = scmp.ne.s32.totalorder %s200, %s201
    %p215 = scmp.eq.s32.totalorder %s20, 3
    %p216 = por %p214, %p215
    %p218 = scmp.ne.s32.totalorder %s201, %s217
    %p219 = scmp.eq.s32.totalorder %s20, 0
    %p220 = por %p218, %p219
    %p221 = scmp.le.s32.totalorder 1, %s14
    %p222 = scmp.lt.s32.totalorder %s14, 5
    %p223 = pnand %p221, %p222
    %p224 = pneg %p223
    // Predicated region
    $region9: #{tpu_custom_call.1} parent=5 // pred_check
      _
    $region10: #{tpu_custom_call.1} parent=5 // pred_check_branch
      %226 = sbr.rel (%p223) target = $region12
    $region11: #{tpu_custom_call.1} parent=5 // pred_region
      %s227 = ssub.s32 %s14, 1
      // Predicated region
      $region13: #{tpu_custom_call.1} parent=11 // pred_check
        %p228 = pneg %p61
      $region14: #{tpu_custom_call.1} parent=11 // pred_check_branch
        %230 = sbr.rel (%p228) target = $region16
      $region15: #{tpu_custom_call.1} parent=11 // pred_region
        _
      $region16: #{tpu_custom_call.1} parent=11 // pred_fallthru
        _
      // Predicated region
      $region17: #{tpu_custom_call.1} parent=11 // pred_check
        %p231 = pneg %p82
      $region18: #{tpu_custom_call.1} parent=11 // pred_check_branch
        %233 = sbr.rel (%p231) target = $region20
      $region19: #{tpu_custom_call.1} parent=11 // pred_region
        _
      $region20: #{tpu_custom_call.1} parent=11 // pred_fallthru
        _
      // Predicated region
      $region21: #{tpu_custom_call.1} parent=11 // pred_check
        %p234 = pneg %p103
      $region22: #{tpu_custom_call.1} parent=11 // pred_check_branch
        %236 = sbr.rel (%p234) target = $region24
      $region23: #{tpu_custom_call.1} parent=11 // pred_region
        _
      $region24: #{tpu_custom_call.1} parent=11 // pred_fallthru
        _
      // Predicated region
      $region25: #{tpu_custom_call.1} parent=11 // pred_check
        %p237 = pneg %p124
      $region26: #{tpu_custom_call.1} parent=11 // pred_check_branch
        %239 = sbr.rel (%p237) target = $region28
      $region27: #{tpu_custom_call.1} parent=11 // pred_region
        _
      $region28: #{tpu_custom_call.1} parent=11 // pred_fallthru
        _
      // Predicated region
      $region29: #{tpu_custom_call.1} parent=11 // pred_check
        %p240 = pneg %p145
      $region30: #{tpu_custom_call.1} parent=11 // pred_check_branch
        %242 = sbr.rel (%p240) target = $region32
      $region31: #{tpu_custom_call.1} parent=11 // pred_region
        _
      $region32: #{tpu_custom_call.1} parent=11 // pred_fallthru
        _
      // Predicated region
      $region33: #{tpu_custom_call.1} parent=11 // pred_check
        %p243 = pneg %p166
      $region34: #{tpu_custom_call.1} parent=11 // pred_check_branch
        %245 = sbr.rel (%p243) target = $region36
      $region35: #{tpu_custom_call.1} parent=11 // pred_region
        _
      $region36: #{tpu_custom_call.1} parent=11 // pred_fallthru
        _
      // Predicated region
      $region37: #{tpu_custom_call.1} parent=11 // pred_check
        %p246 = pneg %p187
      $region38: #{tpu_custom_call.1} parent=11 // pred_check_branch
        %248 = sbr.rel (%p246) target = $region40
      $region39: #{tpu_custom_call.1} parent=11 // pred_region
        _
      $region40: #{tpu_custom_call.1} parent=11 // pred_fallthru
        _
    $region12: #{tpu_custom_call.1} parent=5 // pred_fallthru
      _
    %p249 = scmp.lt.s32.totalorder %s14, 4
    // Predicated region
    $region41: #{tpu_custom_call.1} parent=5 // pred_check
      %p250 = pneg %p249
    $region42: #{tpu_custom_call.1} parent=5 // pred_check_branch
      %252 = sbr.rel (%p250) target = $region44
    $region43: #{tpu_custom_call.1} parent=5 // pred_region
      // Predicated region
      $region45: #{tpu_custom_call.1} parent=43 // pred_check
        %p253 = pneg %p34
      $region46: #{tpu_custom_call.1} parent=43 // pred_check_branch
        %255 = sbr.rel (%p253) target = $region48
      $region47: #{tpu_custom_call.1} parent=43 // pred_region
        %s256 = smul.u32 4, %s14
        %p257 = scmp.lt.s32.totalorder %s256, 15
        %s258 = scalar_select %p257, %s256, 15
        %s259 = smul.addr %s258, 2
        %s260 = smul.addr %s259, 4
        %s261 = scalar_lea.vmem %s0, %s260
        %s262 = smul.u32 4, %s14
      $region48: #{tpu_custom_call.1} parent=43 // pred_fallthru
        _
    $region44: #{tpu_custom_call.1} parent=5 // pred_fallthru
      _
    %p263 = scmp.le.s32.totalorder 1, %s14
    %p264 = scmp.lt.s32.totalorder %s14, 5
    %p265 = pnand %p263, %p264
    %p266 = pneg %p265
    // Predicated region
    $region49: #{tpu_custom_call.1} parent=5 // pred_check
      _
    $region50: #{tpu_custom_call.1} parent=5 // pred_check_branch
      %268 = sbr.rel (%p265) target = $region52
    $region51: #{tpu_custom_call.1} parent=5 // pred_region
      %s269 = ssub.s32 %s14, 1
      %s270 = smul.u32 4, %s19
      %p271 = scmp.lt.s32.totalorder %s270, 15
      %s272 = scalar_select %p271, %s270, 15
      %s273 = smul.addr %s272, 2
      %s274 = smul.addr %s273, 4
      %s275 = scalar_lea.vmem %s0, %s274
      %p276 = pneg %p40
      %p277 = pneg %p37
      %p278 = pneg %p61
      %p279 = pneg %p58
      %p280 = pneg %p82
      %p281 = pneg %p79
      %p282 = pneg %p103
      %p283 = pneg %p100
      %p284 = pneg %p124
      %p285 = pneg %p121
      %p286 = pneg %p145
      %p287 = pneg %p142
      %p288 = pneg %p166
      %p289 = pneg %p163
      %p290 = pneg %p187
      %p291 = pneg %p184
      %p292 = pneg %p213
      %p293 = pneg %p210
      %s294 = smul.u32 4, %s19
      %p295 = scmp.lt.s32.totalorder %s294, 15
      %s296 = scalar_select %p295, %s294, 15
      %s297 = smul.addr %s296, 8
      %s298 = scalar_lea.vmem %s8, %s297
      %s299 = smul.u32 4, %s19
      %p300 = scmp.lt.s32.totalorder %s299, 15
      %s301 = scalar_select %p300, %s299, 15
      %s302 = smul.addr %s301, 2
      %s303 = smul.addr %s302, 4
      %s304 = scalar_lea.vmem %s0, %s303
      %s305 = smul.u32 4, %s19
      %s306 = smul.u32 4, %s19
      %p307 = scmp.lt.s32.totalorder %s306, 15
      %s308 = scalar_select %p307, %s306, 15
      %s309 = smul.addr %s308, 8
      %s310 = scalar_lea.vmem %s8, %s309
      %s311 = smul.u32 4, %s19
      %v313 = vld [vmem:[%s304] sm:$0xff]
      %v314 = vld [vmem:[%s304 + $0x8] sm:$0xff]
      %v315 = vld [vmem:[%s304 + $0x10] sm:$0xff]
      %v316 = vld [vmem:[%s304 + $0x18] sm:$0xff]
      %v317 = vld [vmem:[%s1] sm:$0xf]
      %v318 = vld [vmem:[%s1 + $0x4] sm:$0xf]
      %v319 = vld [vmem:[%s1 + $0x8] sm:$0xf]
      %v320 = vld [vmem:[%s1 + $0xc] sm:$0xf]
      %v321 = vld [vmem:[%s1 + $0x10] sm:$0xf]
      %v322 = vld [vmem:[%s1 + $0x14] sm:$0xf]
      %v323 = vld [vmem:[%s1 + $0x18] sm:$0xf]
      %v324 = vld [vmem:[%s1 + $0x1c] sm:$0xf]
      %v325 = vld [vmem:[%s1 + $0x20] sm:$0xf]
      %v326 = vld [vmem:[%s1 + $0x24] sm:$0xf]
      %v327 = vld [vmem:[%s1 + $0x28] sm:$0xf]
      %v328 = vld [vmem:[%s1 + $0x2c] sm:$0xf]
      %v329 = vld [vmem:[%s1 + $0x30] sm:$0xf]
      %v330 = vld [vmem:[%s1 + $0x34] sm:$0xf]
      %v331 = vld [vmem:[%s1 + $0x38] sm:$0xf]
      %v332 = vld [vmem:[%s1 + $0x3c] sm:$0xf]
      %v333 = vld [vmem:[%s1 + $0x40] sm:$0xf]
      %v334 = vld [vmem:[%s1 + $0x44] sm:$0xf]
      %v335 = vld [vmem:[%s2] sm:$0x1]
      %v337 = vlaneseq
      %v338 = vshrl.u32 %v337, 7
      %v339 = vsub.s32 0, %v338
      %v340 = vrot.slane %v335, %v339
      %v346 = vunpack.c.l.b16 %v313
      %v347 = vunpack.c.h.b16 %v313
      %v348 = vunpack.c.l.b16 %v314
      %v349 = vunpack.c.h.b16 %v314
      %v350 = vunpack.c.l.b16 %v315
      %v351 = vunpack.c.h.b16 %v315
      %v352 = vunpack.c.l.b16 %v316
      %v353 = vunpack.c.h.b16 %v316
      %v354 = vpack.c.b16 %v348, %v346
      %v355 = vpack.c.b16 %v349, %v347
      %v356 = vpack.c.b16 %v352, %v350
      %v357 = vpack.c.b16 %v353, %v351
      %v378 = vunpack.c.l.b16 %v317
      %v379 = vunpack.c.l.b16 %v318
      %v380 = vunpack.c.l.b16 %v319
      %v381 = vunpack.c.l.b16 %v320
      %v382 = vunpack.c.l.b16 %v321
      %v383 = vunpack.c.l.b16 %v322
      %v384 = vunpack.c.l.b16 %v323
      %v385 = vunpack.c.l.b16 %v324
      %v386 = vunpack.c.l.b16 %v325
      %v387 = vunpack.c.l.b16 %v326
      %v388 = vunpack.c.l.b16 %v327
      %v389 = vunpack.c.l.b16 %v328
      %v390 = vunpack.c.l.b16 %v329
      %v391 = vunpack.c.l.b16 %v330
      %v392 = vunpack.c.l.b16 %v331
      %v393 = vunpack.c.l.b16 %v332
      %v394 = vunpack.c.l.b16 %v333
      %v395 = vunpack.c.l.b16 %v334
      %v396 = vpack.c.b16 %v379, %v378
      %v397 = vpack.c.b16 %v381, %v380
      %v398 = vpack.c.b16 %v383, %v382
      %v399 = vpack.c.b16 %v385, %v384
      %v400 = vpack.c.b16 %v387, %v386
      %v401 = vpack.c.b16 %v389, %v388
      %v402 = vpack.c.b16 %v391, %v390
      %v403 = vpack.c.b16 %v393, %v392
      %v404 = vpack.c.b16 %v395, %v394
      %vm414 = vcmask 130048
      %v416 = vsel %vm414, %v355, 0
      %v419 = vsel %vm414, %v357, 0
      %421 = vmatprep.subr.bf16.mxu0 0
      %422 = vmatpush1.bf16.msra.mxu0 %v403
      %423 = vmatprep.subr.bf16.mxu0 0
      %424 = vmatpush1.bf16.msra.mxu0 %v402
      %425 = vmatprep.subr.bf16.mxu0 0
      %426 = vmatpush1.bf16.msra.mxu0 %v401
      %427 = vmatprep.subr.bf16.mxu0 0
      %428 = vmatpush1.bf16.msra.mxu0 %v400
      %429 = vmatprep.subr.bf16.mxu0 0
      %430 = vmatpush1.bf16.msra.mxu0 %v399
      %431 = vmatprep.subr.bf16.mxu0 0
      %432 = vmatpush1.bf16.msra.mxu0 %v398
      %433 = vmatprep.subr.bf16.mxu0 0
      %434 = vmatpush1.bf16.msra.mxu0 %v397
      %435 = vmatprep.subr.bf16.mxu0 0
      %436 = vmatpush1.bf16.msra.mxu0 %v396
      %437 = vmatprep.subr.bf16.mxu0 0
      %438 = vmatpush2.bf16.msra.mxu0 0
      %439 = vmatprep.subr.bf16.mxu0 0
      %440 = vmatpush2.bf16.msra.mxu0 0
      %441 = vmatprep.subr.bf16.mxu0 0
      %442 = vmatpush2.bf16.msra.mxu0 0
      %443 = vmatprep.subr.bf16.mxu0 0
      %444 = vmatpush2.bf16.msra.mxu0 0
      %445 = vmatprep.subr.bf16.mxu0 0
      %446 = vmatpush2.bf16.msra.mxu0 0
      %447 = vmatprep.subr.bf16.mxu0 0
      %448 = vmatpush2.bf16.msra.mxu0 0
      %449 = vmatprep.subr.bf16.mxu0 0
      %450 = vmatpush2.bf16.msra.mxu0 0
      %451 = vmatprep.subr.bf16.mxu0 0
      %452 = vmatpush2.bf16.msra.mxu0 %v404
      %453 = vmatprep.mubr.bf16.mxu0 %v416
      %454 = vmatmul.mubr.bf16.gmra.mxu0 %v354
      %v455 = vpop.f32.mrf.mxu0
      %v456 = vadd.f32 %v340, %v455
      %v457 = vpop.f32.mrf.mxu0
      %v458 = vpop.f32.mrf.mxu0
      %v459 = vadd.f32 %v340, %v458
      %v460 = vpop.f32.mrf.mxu0
      %461 = vmatprep.mubr.bf16.mxu0 %v419
      %462 = vmatmul.mubr.bf16.gmra.mxu0 %v356
      %v463 = vpop.f32.mrf.mxu0
      %v464 = vadd.f32 %v340, %v463
      %v465 = vpop.f32.mrf.mxu0
      %v466 = vpop.f32.mrf.mxu0
      %v467 = vadd.f32 %v340, %v466
      %v468 = vpop.f32.mrf.mxu0
      %469 = vdwg.mxu0
      %v470 = vtanh.pop %v456
      %v471 = vtanh.pop %v459
      %v472 = vtanh.pop %v464
      %v473 = vtanh.pop %v467
      %v474 = vpack.c.bf16 %v471, %v470
      %v475 = vpack.c.bf16 %v473, %v472
      %v476 = vld [vmem:[%s3] sm:$0xf]
      %v477 = vld [vmem:[%s3 + $0x4] sm:$0xf]
      %v478 = vld [vmem:[%s3 + $0x8] sm:$0xf]
      %v479 = vld [vmem:[%s3 + $0xc] sm:$0xf]
      %v480 = vld [vmem:[%s3 + $0x10] sm:$0xf]
      %v481 = vld [vmem:[%s3 + $0x14] sm:$0xf]
      %v482 = vld [vmem:[%s3 + $0x18] sm:$0xf]
      %v483 = vld [vmem:[%s3 + $0x1c] sm:$0xf]
      %v484 = vld [vmem:[%s3 + $0x20] sm:$0xf]
      %v485 = vld [vmem:[%s3 + $0x24] sm:$0xf]
      %v486 = vld [vmem:[%s3 + $0x28] sm:$0xf]
      %v487 = vld [vmem:[%s3 + $0x2c] sm:$0xf]
      %v488 = vld [vmem:[%s3 + $0x30] sm:$0xf]
      %v489 = vld [vmem:[%s3 + $0x34] sm:$0xf]
      %v490 = vld [vmem:[%s3 + $0x38] sm:$0xf]
      %v491 = vld [vmem:[%s3 + $0x3c] sm:$0xf]
      %v492 = vld [vmem:[%s4] sm:$0x1]
      %v494 = vlaneseq
      %v495 = vshrl.u32 %v494, 7
      %v496 = vsub.s32 0, %v495
      %v497 = vrot.slane %v492, %v496
      %v515 = vunpack.c.l.b16 %v476
      %v516 = vunpack.c.l.b16 %v477
      %v517 = vunpack.c.l.b16 %v478
      %v518 = vunpack.c.l.b16 %v479
      %v519 = vunpack.c.l.b16 %v480
      %v520 = vunpack.c.l.b16 %v481
      %v521 = vunpack.c.l.b16 %v482
      %v522 = vunpack.c.l.b16 %v483
      %v523 = vunpack.c.l.b16 %v484
      %v524 = vunpack.c.l.b16 %v485
      %v525 = vunpack.c.l.b16 %v486
      %v526 = vunpack.c.l.b16 %v487
      %v527 = vunpack.c.l.b16 %v488
      %v528 = vunpack.c.l.b16 %v489
      %v529 = vunpack.c.l.b16 %v490
      %v530 = vunpack.c.l.b16 %v491
      %v531 = vpack.c.b16 %v516, %v515
      %v532 = vpack.c.b16 %v518, %v517
      %v533 = vpack.c.b16 %v520, %v519
      %v534 = vpack.c.b16 %v522, %v521
      %v535 = vpack.c.b16 %v524, %v523
      %v536 = vpack.c.b16 %v526, %v525
      %v537 = vpack.c.b16 %v528, %v527
      %v538 = vpack.c.b16 %v530, %v529
      %547 = vmatprep.subr.bf16.mxu0 0
      %548 = vmatpush1.bf16.msra.mxu0 %v538
      %549 = vmatprep.subr.bf16.mxu0 0
      %550 = vmatpush1.bf16.msra.mxu0 %v537
      %551 = vmatprep.subr.bf16.mxu0 0
      %552 = vmatpush1.bf16.msra.mxu0 %v536
      %553 = vmatprep.subr.bf16.mxu0 0
      %554 = vmatpush1.bf16.msra.mxu0 %v535
      %555 = vmatprep.subr.bf16.mxu0 0
      %556 = vmatpush1.bf16.msra.mxu0 %v534
      %557 = vmatprep.subr.bf16.mxu0 0
      %558 = vmatpush1.bf16.msra.mxu0 %v533
      %559 = vmatprep.subr.bf16.mxu0 0
      %560 = vmatpush1.bf16.msra.mxu0 %v532
      %561 = vmatprep.subr.bf16.mxu0 0
      %562 = vmatpush1.bf16.msra.mxu0 %v531
      %563 = vmatprep.subr.bf16.mxu0 0
      %564 = vmatpush2.bf16.msra.mxu0 0
      %565 = vmatprep.subr.bf16.mxu0 0
      %566 = vmatpush2.bf16.msra.mxu0 0
      %567 = vmatprep.subr.bf16.mxu0 0
      %568 = vmatpush2.bf16.msra.mxu0 0
      %569 = vmatprep.subr.bf16.mxu0 0
      %570 = vmatpush2.bf16.msra.mxu0 0
      %571 = vmatprep.subr.bf16.mxu0 0
      %572 = vmatpush2.bf16.msra.mxu0 0
      %573 = vmatprep.subr.bf16.mxu0 0
      %574 = vmatpush2.bf16.msra.mxu0 0
      %575 = vmatprep.subr.bf16.mxu0 0
      %576 = vmatpush2.bf16.msra.mxu0 0
      %577 = vmatprep.subr.bf16.mxu0 0
      %578 = vmatpush2.bf16.msra.mxu0 0
      %579 = vmatprep.mubr.bf16.mxu0 0
      %580 = vmatmul.mubr.bf16.gmra.mxu0 %v474
      %v581 = vpop.f32.mrf.mxu0
      %v582 = vadd.f32 %v497, %v581
      %v583 = vpop.f32.mrf.mxu0
      %v584 = vpop.f32.mrf.mxu0
      %v585 = vadd.f32 %v497, %v584
      %v586 = vpop.f32.mrf.mxu0
      %587 = vmatprep.mubr.bf16.mxu0 0
      %588 = vmatmul.mubr.bf16.gmra.mxu0 %v475
      %v589 = vpop.f32.mrf.mxu0
      %v590 = vadd.f32 %v497, %v589
      %v591 = vpop.f32.mrf.mxu0
      %v592 = vpop.f32.mrf.mxu0
      %v593 = vadd.f32 %v497, %v592
      %v594 = vpop.f32.mrf.mxu0
      %595 = vdwg.mxu0
      %v596 = vtanh.pop %v582
      %v597 = vtanh.pop %v585
      %v598 = vtanh.pop %v590
      %v599 = vtanh.pop %v593
      %v600 = vpack.c.bf16 %v597, %v596
      %v601 = vpack.c.bf16 %v599, %v598
      %v602 = vld [vmem:[%s5] sm:$0xf]
      %v603 = vld [vmem:[%s5 + $0x4] sm:$0xf]
      %v604 = vld [vmem:[%s5 + $0x8] sm:$0xf]
      %v605 = vld [vmem:[%s5 + $0xc] sm:$0xf]
      %v606 = vld [vmem:[%s5 + $0x10] sm:$0xf]
      %v607 = vld [vmem:[%s5 + $0x14] sm:$0xf]
      %v608 = vld [vmem:[%s5 + $0x18] sm:$0xf]
      %v609 = vld [vmem:[%s5 + $0x1c] sm:$0xf]
      %v610 = vld [vmem:[%s5 + $0x20] sm:$0xf]
      %v611 = vld [vmem:[%s5 + $0x24] sm:$0xf]
      %v612 = vld [vmem:[%s5 + $0x28] sm:$0xf]
      %v613 = vld [vmem:[%s5 + $0x2c] sm:$0xf]
      %v614 = vld [vmem:[%s5 + $0x30] sm:$0xf]
      %v615 = vld [vmem:[%s5 + $0x34] sm:$0xf]
      %v616 = vld [vmem:[%s5 + $0x38] sm:$0xf]
      %v617 = vld [vmem:[%s5 + $0x3c] sm:$0xf]
      %v618 = vld [vmem:[%s6] sm:$0x1]
      %v620 = vlaneseq
      %v621 = vshrl.u32 %v620, 7
      %v622 = vsub.s32 0, %v621
      %v623 = vrot.slane %v618, %v622
      %v641 = vunpack.c.l.b16 %v602
      %v642 = vunpack.c.l.b16 %v603
      %v643 = vunpack.c.l.b16 %v604
      %v644 = vunpack.c.l.b16 %v605
      %v645 = vunpack.c.l.b16 %v606
      %v646 = vunpack.c.l.b16 %v607
      %v647 = vunpack.c.l.b16 %v608
      %v648 = vunpack.c.l.b16 %v609
      %v649 = vunpack.c.l.b16 %v610
      %v650 = vunpack.c.l.b16 %v611
      %v651 = vunpack.c.l.b16 %v612
      %v652 = vunpack.c.l.b16 %v613
      %v653 = vunpack.c.l.b16 %v614
      %v654 = vunpack.c.l.b16 %v615
      %v655 = vunpack.c.l.b16 %v616
      %v656 = vunpack.c.l.b16 %v617
      %v657 = vpack.c.b16 %v642, %v641
      %v658 = vpack.c.b16 %v644, %v643
      %v659 = vpack.c.b16 %v646, %v645
      %v660 = vpack.c.b16 %v648, %v647
      %v661 = vpack.c.b16 %v650, %v649
      %v662 = vpack.c.b16 %v652, %v651
      %v663 = vpack.c.b16 %v654, %v653
      %v664 = vpack.c.b16 %v656, %v655
      %673 = vmatprep.subr.bf16.mxu0 0
      %674 = vmatpush1.bf16.msra.mxu0 %v664
      %675 = vmatprep.subr.bf16.mxu0 0
      %676 = vmatpush1.bf16.msra.mxu0 %v663
      %677 = vmatprep.subr.bf16.mxu0 0
      %678 = vmatpush1.bf16.msra.mxu0 %v662
      %679 = vmatprep.subr.bf16.mxu0 0
      %680 = vmatpush1.bf16.msra.mxu0 %v661
      %681 = vmatprep.subr.bf16.mxu0 0
      %682 = vmatpush1.bf16.msra.mxu0 %v660
      %683 = vmatprep.subr.bf16.mxu0 0
      %684 = vmatpush1.bf16.msra.mxu0 %v659
      %685 = vmatprep.subr.bf16.mxu0 0
      %686 = vmatpush1.bf16.msra.mxu0 %v658
      %687 = vmatprep.subr.bf16.mxu0 0
      %688 = vmatpush1.bf16.msra.mxu0 %v657
      %689 = vmatprep.subr.bf16.mxu0 0
      %690 = vmatpush2.bf16.msra.mxu0 0
      %691 = vmatprep.subr.bf16.mxu0 0
      %692 = vmatpush2.bf16.msra.mxu0 0
      %693 = vmatprep.subr.bf16.mxu0 0
      %694 = vmatpush2.bf16.msra.mxu0 0
      %695 = vmatprep.subr.bf16.mxu0 0
      %696 = vmatpush2.bf16.msra.mxu0 0
      %697 = vmatprep.subr.bf16.mxu0 0
      %698 = vmatpush2.bf16.msra.mxu0 0
      %699 = vmatprep.subr.bf16.mxu0 0
      %700 = vmatpush2.bf16.msra.mxu0 0
      %701 = vmatprep.subr.bf16.mxu0 0
      %702 = vmatpush2.bf16.msra.mxu0 0
      %703 = vmatprep.subr.bf16.mxu0 0
      %704 = vmatpush2.bf16.msra.mxu0 0
      %705 = vmatprep.mubr.bf16.mxu0 0
      %706 = vmatmul.mubr.bf16.gmra.mxu0 %v600
      %v707 = vpop.f32.mrf.mxu0
      %v708 = vadd.f32 %v623, %v707
      %v709 = vpop.f32.mrf.mxu0
      %v710 = vpop.f32.mrf.mxu0
      %v711 = vadd.f32 %v623, %v710
      %v712 = vpop.f32.mrf.mxu0
      %713 = vmatprep.mubr.bf16.mxu0 0
      %714 = vmatmul.mubr.bf16.gmra.mxu0 %v601
      %v715 = vpop.f32.mrf.mxu0
      %v716 = vadd.f32 %v623, %v715
      %v717 = vpop.f32.mrf.mxu0
      %v718 = vpop.f32.mrf.mxu0
      %v719 = vadd.f32 %v623, %v718
      %v720 = vpop.f32.mrf.mxu0
      %721 = vdwg.mxu0
      %v722 = vtanh.pop %v708
      %v723 = vtanh.pop %v711
      %v724 = vtanh.pop %v716
      %v725 = vtanh.pop %v719
      %v726 = vld [vmem:[%s7] sm:$0x1]
      %v728 = vlaneseq
      %v729 = vshrl.u32 %v728, 7
      %v730 = vsub.s32 0, %v729
      %v731 = vrot.slane %v726, %v730
      %v733 = vmul.f32 %v722, %v731
      %v734 = vmul.f32 %v723, %v731
      %v735 = vmul.f32 %v724, %v731
      %v736 = vmul.f32 %v725, %v731
      %737 = vadd.xlane.f32.xlu0 %v733
      %v738 = vpop.xlane.xlu0 %737
      %739 = vadd.xlane.f32.xlu0 %v734
      %v740 = vpop.xlane.xlu0 %739
      %741 = vadd.xlane.f32.xlu0 %v735
      %v742 = vpop.xlane.xlu0 %741
      %743 = vadd.xlane.f32.xlu0 %v736
      %v744 = vpop.xlane.xlu0 %743
      %vm745 = vcmask 7168
      %746 = vst.msk [vmem:[%s310] sm:$0xff] %vm745, %v738
      %747 = vst.msk [vmem:[%s310 + $0x8] sm:$0xff] %vm745, %v740
      %748 = vst.msk [vmem:[%s310 + $0x10] sm:$0xff] %vm745, %v742
      %749 = vst.msk [vmem:[%s310 + $0x18] sm:$0xff] %vm745, %v744
      %s750 = smul.u32 4, %s19
      %p751 = scmp.lt.s32.totalorder %s750, 15
      %s752 = scalar_select %p751, %s750, 15
      %s753 = smul.addr %s752, 8
      %s754 = scalar_lea.vmem %s8, %s753
      // Predicated region
      $region53: #{tpu_custom_call.1} parent=51 // pred_check
        %p755 = pneg %p210
      $region54: #{tpu_custom_call.1} parent=51 // pred_check_branch
        %757 = sbr.rel (%p755) target = $region56
      $region55: #{tpu_custom_call.1} parent=51 // pred_region
        %s758 = smul.u32 4, %s19
      $region56: #{tpu_custom_call.1} parent=51 // pred_fallthru
        _
    $region52: #{tpu_custom_call.1} parent=5 // pred_fallthru
      _
    %p759 = scmp.le.s32.totalorder 2, %s14
    // Predicated region
    $region57: #{tpu_custom_call.1} parent=5 // pred_check
      %p760 = pneg %p759
    $region58: #{tpu_custom_call.1} parent=5 // pred_check_branch
      %762 = sbr.rel (%p760) target = $region60
    $region59: #{tpu_custom_call.1} parent=5 // pred_region
      %s763 = ssub.s32 %s14, 2
      // Predicated region
      $region61: #{tpu_custom_call.1} parent=59 // pred_check
        %p764 = pneg %p216
      $region62: #{tpu_custom_call.1} parent=59 // pred_check_branch
        %766 = sbr.rel (%p764) target = $region64
      $region63: #{tpu_custom_call.1} parent=59 // pred_region
        %s767 = smul.u32 4, %s20
        %p768 = scmp.lt.s32.totalorder %s767, 15
        %s769 = scalar_select %p768, %s767, 15
        %s770 = smul.addr %s769, 8
        %s771 = scalar_lea.vmem %s8, %s770
      $region64: #{tpu_custom_call.1} parent=59 // pred_fallthru
        _
    $region60: #{tpu_custom_call.1} parent=5 // pred_fallthru
      _
  $region6: #{tpu_custom_call.1} parent=0 // loop_footer
    %s18 = sadd.s32 1, %s14
  $region7: #{tpu_custom_call.1} parent=0 // loop_footer_branch
    %13 = sbr.rel target = $region3
  $region8: #{tpu_custom_call.1} parent=0 // loop_exit
    _

</llo_original>
